<compile_context>
chip_gen: v5e
topology: v5e:2x2
jax: 0.10.0
libtpu: 0.0.40
codegen_flags: <defaults>
</compile_context>

<pallas_src>
import jax
import jax.numpy as jnp
from jax.experimental import pallas as pl
from jax.experimental.pallas import tpu as pltpu

DEFAULT_TILE_B = 8192   # rows per batch tile (multiple of 8 f32 sublanes)


def _round_up(n, m):
    return ((n + m - 1) // m) * m


def _sigmoid(z):
    # Single EUP op (tanh) + cheap VPU fixup, instead of exp + reciprocal.
    return 0.5 * jnp.tanh(0.5 * z) + 0.5


def _mlp_kernel(x_ref, w1_ref, b1_ref, w2_ref, b2_ref, o_ref):
    x = x_ref[...]
    # Layer 1: Linear + Sigmoid
    z1 = jnp.dot(x, w1_ref[...], preferred_element_type=jnp.float32) + b1_ref[...]
    h = _sigmoid(z1)
    # Layer 2: Linear + Sigmoid
    z2 = jnp.dot(h, w2_ref[...], preferred_element_type=jnp.float32) + b2_ref[...]
    o_ref[...] = _sigmoid(z2).astype(o_ref.dtype)


def neural_net_forward(x, w1, b1, w2, b2, *, tile_b=DEFAULT_TILE_B):
    """Forward pass of the tic-tac-toe MLP (Linear->Sigmoid->Linear->Sigmoid).

    x:  (B, F)    float32 board encodings
    w1: (F, F)    layer-1 weight, stored pre-transposed as (in, out)
    b1: (1, F)    layer-1 bias
    w2: (F, Fout) layer-2 weight, (in, out)
    b2: (1, Fout) layer-2 bias

    NOTE: PyTorch nn.Linear stores weights as (out, in); callers porting real
    checkpoints must transpose to the (in, out) convention used here.
    """
    B, F = x.shape
    assert w1.shape[0] == F and w2.shape[0] == w1.shape[1]
    out_features = w2.shape[1]

    # Batch tile: multiple of 8 sublanes, aim for >= 2 grid steps (megacore
    # sharding on v7x), and never larger than tile_b.
    tb = min(tile_b, max(8, _round_up(-(-B // 2), 8)))
    Bp = _round_up(B, tb)
    xp = x if Bp == B else jnp.zeros((Bp, F), x.dtype).at[:B, :].set(x)

    grid = (Bp // tb,)
    out = pl.pallas_call(
        _mlp_kernel,
        out_shape=jax.ShapeDtypeStruct((Bp, out_features), x.dtype),
        grid_spec=pltpu.PrefetchScalarGridSpec(
            num_scalar_prefetch=0,
            grid=grid,
            in_specs=[
                # x tile: last dim equals the full array dim -> legal unpadded block.
                pl.BlockSpec((tb, F), lambda i: (i, 0)),
                pl.BlockSpec(w1.shape, lambda i: (0, 0)),   # w1 (resident)
                pl.BlockSpec(b1.shape, lambda i: (0, 0)),   # b1 (resident)
                pl.BlockSpec(w2.shape, lambda i: (0, 0)),   # w2 (resident)
                pl.BlockSpec(b2.shape, lambda i: (0, 0)),   # b2 (resident)
            ],
            out_specs=pl.BlockSpec((tb, out_features), lambda i: (i, 0)),
        ),
        compiler_params=pltpu.CompilerParams(
            dimension_semantics=("parallel",),  # megacore-shardable on v7x
        ),
    )(xp, w1, b1, w2, b2)

    return out if Bp == B else out[:B]


def init_params(key, dimension=3, frames=1):
    """Deterministic init mimicking nn.Linear default (uniform(-1/sqrt(in), 1/sqrt(in)))."""
    flat = dimension * dimension
    f_in1 = frames * flat
    f_out1 = frames * flat
    f_out2 = flat
    k1, k2, k3, k4 = jax.random.split(key, 4)
    bound1 = 1.0 / jnp.sqrt(f_in1)
    bound2 = 1.0 / jnp.sqrt(f_out1)
    # Stored pre-transposed: (in_features, out_features)
    w1 = jax.random.uniform(k1, (f_in1, f_out1), jnp.float32, -bound1, bound1)
    b1 = jax.random.uniform(k2, (1, f_out1), jnp.float32, -bound1, bound1)
    w2 = jax.random.uniform(k3, (f_out1, f_out2), jnp.float32, -bound2, bound2)
    b2 = jax.random.uniform(k4, (1, f_out2), jnp.float32, -bound2, bound2)
    return w1, b1, w2, b2


def reference_forward(x, w1, b1, w2, b2):
    h = jax.nn.sigmoid(x @ w1 + b1)
    return jax.nn.sigmoid(h @ w2 + b2)


if __name__ == "__main__":
    key = jax.random.PRNGKey(0)
    k_params, k_x = jax.random.split(key)

    dimension = 3                            # tic-tac-toe board
    frames = 1                               # in_neural_net_input_frames
    flat = frames * dimension * dimension    # 9
    batch = 8

    w1, b1, w2, b2 = init_params(k_params, dimension, frames)
    # Board encoding in [-1, 1] (empty/X/O style values), batch of boards.
    x = jax.random.uniform(k_x, (batch, flat), jnp.float32, -1.0, 1.0)

    # jit the whole wrapper so any batch pad/slice fuses with the kernel launch.
    fwd = jax.jit(neural_net_forward)
    out = jax.block_until_ready(fwd(x, w1, b1, w2, b2))

    ref = reference_forward(x, w1, b1, w2, b2)
    assert out.shape == (batch, flat)
    assert jnp.allclose(out, ref, atol=1e-4, rtol=1e-4)

    print("KERNEL_OK")
</pallas_src>

<mosaic_0001>
module attributes {stable_mosaic.version = 11 : i64} {
  func.func @_mlp_kernel(%arg0: i32, %arg1: memref<8x9xf32, #tpu.memory_space<vmem>>, %arg2: memref<9x9xf32, #tpu.memory_space<vmem>>, %arg3: memref<1x9xf32, #tpu.memory_space<vmem>>, %arg4: memref<9x9xf32, #tpu.memory_space<vmem>>, %arg5: memref<1x9xf32, #tpu.memory_space<vmem>>, %arg6: memref<8x9xf32, #tpu.memory_space<vmem>>) attributes {dimension_semantics = [#tpu.dimension_semantics<parallel>], iteration_bounds = array<i64: 1>, scalar_prefetch = 0 : i64, scratch_operands = 0 : i64, tpu.core_type = #tpu.core_type<tc>, window_params = [{transform_indices = @transform_0, window_bounds = array<i64: 8, 9>}, {pipeline_mode = #tpu.pipeline_mode<synchronous>, transform_indices = @transform_1, window_bounds = array<i64: 9, 9>}, {pipeline_mode = #tpu.pipeline_mode<synchronous>, transform_indices = @transform_2, window_bounds = array<i64: 1, 9>}, {pipeline_mode = #tpu.pipeline_mode<synchronous>, transform_indices = @transform_3, window_bounds = array<i64: 9, 9>}, {pipeline_mode = #tpu.pipeline_mode<synchronous>, transform_indices = @transform_4, window_bounds = array<i64: 1, 9>}, {transform_indices = @transform_5, window_bounds = array<i64: 8, 9>}]} {
    %c0 = arith.constant 0 : index
    %c0_0 = arith.constant 0 : index
    %0 = vector.load %arg1[%c0, %c0_0] : memref<8x9xf32, #tpu.memory_space<vmem>>, vector<8x9xf32>
    %c0_1 = arith.constant 0 : index
    %c0_2 = arith.constant 0 : index
    %1 = vector.load %arg2[%c0_1, %c0_2] : memref<9x9xf32, #tpu.memory_space<vmem>>, vector<9x9xf32>
    %cst = arith.constant dense<0.000000e+00> : vector<8x9xf32>
    %2 = tpu.matmul %0, %1, %cst {dimension_numbers = #tpu.dot_dimension_numbers<[1], [0], [0], [1], [0, 0, 1, 1], [], []>} : vector<8x9xf32>, vector<9x9xf32>, vector<8x9xf32> -> vector<8x9xf32>
    %c0_3 = arith.constant 0 : index
    %c0_4 = arith.constant 0 : index
    %3 = vector.load %arg3[%c0_3, %c0_4] : memref<1x9xf32, #tpu.memory_space<vmem>>, vector<1x9xf32>
    %4 = vector.broadcast %3 : vector<1x9xf32> to vector<8x9xf32>
    %5 = arith.addf %2, %4 : vector<8x9xf32>
    %cst_5 = arith.constant 5.000000e-01 : f32
    %6 = vector.broadcast %cst_5 : f32 to vector<8x9xf32>
    %7 = arith.mulf %6, %5 : vector<8x9xf32>
    %8 = math.tanh %7 : vector<8x9xf32>
    %cst_6 = arith.constant 5.000000e-01 : f32
    %9 = vector.broadcast %cst_6 : f32 to vector<8x9xf32>
    %10 = arith.mulf %9, %8 : vector<8x9xf32>
    %cst_7 = arith.constant 5.000000e-01 : f32
    %11 = vector.broadcast %cst_7 : f32 to vector<8x9xf32>
    %12 = arith.addf %10, %11 : vector<8x9xf32>
    %c0_8 = arith.constant 0 : index
    %c0_9 = arith.constant 0 : index
    %13 = vector.load %arg4[%c0_8, %c0_9] : memref<9x9xf32, #tpu.memory_space<vmem>>, vector<9x9xf32>
    %cst_10 = arith.constant dense<0.000000e+00> : vector<8x9xf32>
    %14 = tpu.matmul %12, %13, %cst_10 {dimension_numbers = #tpu.dot_dimension_numbers<[1], [0], [0], [1], [0, 0, 1, 1], [], []>} : vector<8x9xf32>, vector<9x9xf32>, vector<8x9xf32> -> vector<8x9xf32>
    %c0_11 = arith.constant 0 : index
    %c0_12 = arith.constant 0 : index
    %15 = vector.load %arg5[%c0_11, %c0_12] : memref<1x9xf32, #tpu.memory_space<vmem>>, vector<1x9xf32>
    %16 = vector.broadcast %15 : vector<1x9xf32> to vector<8x9xf32>
    %17 = arith.addf %14, %16 : vector<8x9xf32>
    %cst_13 = arith.constant 5.000000e-01 : f32
    %18 = vector.broadcast %cst_13 : f32 to vector<8x9xf32>
    %19 = arith.mulf %18, %17 : vector<8x9xf32>
    %20 = math.tanh %19 : vector<8x9xf32>
    %cst_14 = arith.constant 5.000000e-01 : f32
    %21 = vector.broadcast %cst_14 : f32 to vector<8x9xf32>
    %22 = arith.mulf %21, %20 : vector<8x9xf32>
    %cst_15 = arith.constant 5.000000e-01 : f32
    %23 = vector.broadcast %cst_15 : f32 to vector<8x9xf32>
    %24 = arith.addf %22, %23 : vector<8x9xf32>
    %c0_16 = arith.constant 0 : index
    %c0_17 = arith.constant 0 : index
    %25 = vector.load %arg6[%c0_16, %c0_17] : memref<8x9xf32, #tpu.memory_space<vmem>>, vector<8x9xf32>
    tpu.vector_store %arg6[%c0_16, %c0_17], %24 {strides = array<i32>} : memref<8x9xf32, #tpu.memory_space<vmem>>, vector<8x9xf32>,
    return
  }
  func.func @transform_0(%arg0: i32) -> (i32, i32) {
    %c0_i32 = arith.constant 0 : i32
    %c0_i32_0 = arith.constant 0 : i32
    return %arg0, %c0_i32 : i32, i32
  }
  func.func @transform_1(%arg0: i32) -> (i32, i32) {
    %c0_i32 = arith.constant 0 : i32
    %c0_i32_0 = arith.constant 0 : i32
    %c0_i32_1 = arith.constant 0 : i32
    return %c0_i32, %c0_i32_0 : i32, i32
  }
  func.func @transform_2(%arg0: i32) -> (i32, i32) {
    %c0_i32 = arith.constant 0 : i32
    %c0_i32_0 = arith.constant 0 : i32
    %c0_i32_1 = arith.constant 0 : i32
    return %c0_i32, %c0_i32_0 : i32, i32
  }
  func.func @transform_3(%arg0: i32) -> (i32, i32) {
    %c0_i32 = arith.constant 0 : i32
    %c0_i32_0 = arith.constant 0 : i32
    %c0_i32_1 = arith.constant 0 : i32
    return %c0_i32, %c0_i32_0 : i32, i32
  }
  func.func @transform_4(%arg0: i32) -> (i32, i32) {
    %c0_i32 = arith.constant 0 : i32
    %c0_i32_0 = arith.constant 0 : i32
    %c0_i32_1 = arith.constant 0 : i32
    return %c0_i32, %c0_i32_0 : i32, i32
  }
  func.func @transform_5(%arg0: i32) -> (i32, i32) {
    %c0_i32 = arith.constant 0 : i32
    %c0_i32_0 = arith.constant 0 : i32
    return %arg0, %c0_i32 : i32, i32
  }
}

</mosaic_0001>

<llo_original>
// kernel: neural_net_forward.1
$region0: #{neural_net_forward.1}
  #allocation0 [shape = 'u32[]', space=smem, size = 0x4, offset = 0x4, fixed_abs, tag = 'smem constant byte address 0x4 - core index']
  #allocation1 [shape = 'u32[72,128]{1,0:T(1,128)}', space=vmem, size = 0x9000, scoped, tag = 'internal scratch']
  %s0 = inlined_call_operand.hbm [shape: f32[8,9], index: 0, kind: input, shape index: {}]
  %s1 = inlined_call_operand.hbm [shape: f32[9,9], index: 1, kind: input, shape index: {}]
  %s2 = inlined_call_operand.vmem [shape: f32[1,9], index: 2, kind: input, shape index: {}]
  %s3 = inlined_call_operand.hbm [shape: f32[9,9], index: 3, kind: input, shape index: {}]
  %s4 = inlined_call_operand.vmem [shape: f32[1,9], index: 4, kind: input, shape index: {}]
  %s5 = inlined_call_operand.hbm [shape: f32[8,9], index: 5, kind: output, shape index: {}]
  %s6 = sld [smem:[#allocation0]]
  $region42: #{neural_net_forward.1} parent=0
    _
  %s8 = ssub.s32 1, %s6
  %s9 = scalar_select 0, %s8, %s6
  $region1: #{neural_net_forward.1} parent=0
    #allocation2 [shape = 'u8[4096]{0}', space=vmem, size = 0x1000, scoped, tag = 'input window, operand 0, single buffered']
    #allocation3 [shape = 's32[1]{0}', space=sflag, size = 0x4, scoped, tag = 'scoped memory for neural_net_forward.1']
    #allocation4 [shape = 's32[1]{0}', space=sflag, size = 0x4, scoped, tag = 'scoped memory for neural_net_forward.1']
    #allocation5 [shape = 'u8[8192]{0}', space=vmem, size = 0x2000, scoped, tag = 'input window, operand 1, single buffered']
    #allocation6 [shape = 's32[1]{0}', space=sflag, size = 0x4, scoped, tag = 'scoped memory for neural_net_forward.1']
    #allocation7 [shape = 'u8[8192]{0}', space=vmem, size = 0x2000, scoped, tag = 'input window, operand 3, single buffered']
    #allocation8 [shape = 'u8[4096]{0}', space=vmem, size = 0x1000, scoped, tag = 'output window, operand 0, single buffered']
    %10 = vsyncpa [#allocation3], 0
    %11 = vsyncpa [#allocation6], 0
    %12 = vsyncpa [#allocation4], 0
    // Predicated region
    $region2: #{neural_net_forward.1} parent=1 // pred_check
      _
    $region3: #{neural_net_forward.1} parent=1 // pred_check_branch
      %14 = sbr.rel (0) target = $region5
    $region4: #{neural_net_forward.1} parent=1 // pred_region
      %16 = vsyncadd [#allocation3], 0
      %s18 = sshll.u32 %s0, 4
      %s19 = int_to_ptr.hbm [resolvable:$true] %s18
      %s20 = sshll.u32 [#allocation2], 4
      %s21 = int_to_ptr.vmem [resolvable:$true] %s20
      %23 = dma.hbm_to_vmem [thread:$0]  %s19, 128, %s21, [#allocation3]
    $region5: #{neural_net_forward.1} parent=1 // pred_fallthru
      _
    // Predicated region
    $region6: #{neural_net_forward.1} parent=1 // pred_check
      _
    $region7: #{neural_net_forward.1} parent=1 // pred_check_branch
      %25 = sbr.rel (0) target = $region9
    $region8: #{neural_net_forward.1} parent=1 // pred_region
      %27 = vsyncadd [#allocation6], 0
      %s28 = sshll.u32 %s1, 4
      %s29 = int_to_ptr.hbm [resolvable:$true] %s28
      %s30 = sshll.u32 [#allocation5], 4
      %s31 = int_to_ptr.vmem [resolvable:$true] %s30
      %36 = dma.hbm_to_vmem [thread:$0]  %s29, 256, %s31, [#allocation6], 128, 128, 8
    $region9: #{neural_net_forward.1} parent=1 // pred_fallthru
      _
    // Predicated region
    $region10: #{neural_net_forward.1} parent=1 // pred_check
      _
    $region11: #{neural_net_forward.1} parent=1 // pred_check_branch
      %38 = sbr.rel (0) target = $region13
    $region12: #{neural_net_forward.1} parent=1 // pred_region
      _
    $region13: #{neural_net_forward.1} parent=1 // pred_fallthru
      _
    // Predicated region
    $region14: #{neural_net_forward.1} parent=1 // pred_check
      _
    $region15: #{neural_net_forward.1} parent=1 // pred_check_branch
      %40 = sbr.rel (0) target = $region17
    $region16: #{neural_net_forward.1} parent=1 // pred_region
      %42 = vsyncadd [#allocation6], 0
      %s43 = sshll.u32 %s3, 4
      %s44 = int_to_ptr.hbm [resolvable:$true] %s43
      %s45 = sshll.u32 [#allocation7], 4
      %s46 = int_to_ptr.vmem [resolvable:$true] %s45
      %51 = dma.hbm_to_vmem [thread:$0]  %s44, 256, %s46, [#allocation6], 128, 128, 8
    $region17: #{neural_net_forward.1} parent=1 // pred_fallthru
      _
    // Predicated region
    $region18: #{neural_net_forward.1} parent=1 // pred_check
      _
    $region19: #{neural_net_forward.1} parent=1 // pred_check_branch
      %53 = sbr.rel (0) target = $region21
    $region20: #{neural_net_forward.1} parent=1 // pred_region
      _
    $region21: #{neural_net_forward.1} parent=1 // pred_fallthru
      _
    // Predicated region
    $region22: #{neural_net_forward.1} parent=1 // pred_check
      _
    $region23: #{neural_net_forward.1} parent=1 // pred_check_branch
      %55 = sbr.rel (0) target = $region25
    $region24: #{neural_net_forward.1} parent=1 // pred_region
      %57 = dma.done [#allocation3], 128
    $region25: #{neural_net_forward.1} parent=1 // pred_fallthru
      _
    // Predicated region
    $region26: #{neural_net_forward.1} parent=1 // pred_check
      _
    $region27: #{neural_net_forward.1} parent=1 // pred_check_branch
      %59 = sbr.rel (0) target = $region29
    $region28: #{neural_net_forward.1} parent=1 // pred_region
      %61 = dma.done [#allocation6], 256
    $region29: #{neural_net_forward.1} parent=1 // pred_fallthru
      _
    // Predicated region
    $region30: #{neural_net_forward.1} parent=1 // pred_check
      _
    $region31: #{neural_net_forward.1} parent=1 // pred_check_branch
      %63 = sbr.rel (0) target = $region33
    $region32: #{neural_net_forward.1} parent=1 // pred_region
      %65 = dma.done [#allocation6], 256
    $region33: #{neural_net_forward.1} parent=1 // pred_fallthru
      _
    %v66 = vld [vmem:[#allocation2] sm:$0xff]
    %v67 = vld [vmem:[#allocation5] sm:$0xff]
    %v68 = vld [vmem:[#allocation5 + $0x8] sm:$0x1]
    %v69 = vld [vmem:[%s2] sm:$0x1]
    %v71 = vperm.slane %v69, 0
    %vm73 = vcmask 72704
    %v75 = vsel %vm73, %v66, 0
    %vm77 = vcmask 1040384
    %v79 = vsel %vm77, %v68, 0
    %81 = vmatpush.msra.mxu0 0.0
    %82 = vmatpush.msra.mxu0 0.0
    %83 = vmatpush.msra.mxu0 0.0
    %84 = vmatpush.msra.mxu0 0.0
    %85 = vmatpush.msra.mxu0 0.0
    %86 = vmatpush.msra.mxu0 0.0
    %87 = vmatpush.msra.mxu0 0.0
    %88 = vmatpush.msra.mxu0 0.0
    %89 = vmatpush.msra.mxu0 0.0
    %90 = vmatpush.msra.mxu0 0.0
    %91 = vmatpush.msra.mxu0 0.0
    %92 = vmatpush.msra.mxu0 0.0
    %93 = vmatpush.msra.mxu0 0.0
    %94 = vmatpush.msra.mxu0 0.0
    %95 = vmatpush.msra.mxu0 %v79
    %96 = vmatpush.msra.mxu0 %v67
    %97 = vmatmul.f32.gmra.mxu0 %v75
    %v98 = vpop.f32.mrf.mxu0
    %v99 = vadd.f32 %v71, %v98
    %100 = vdwg.mxu0
    %v101 = vmul.f32 %v99, 0.5
    %v102 = vtanh.pop %v101
    %v103 = vmul.f32 %v102, 0.5
    %v104 = vadd.f32 %v103, 0.5
    %v105 = vld [vmem:[#allocation7] sm:$0xff]
    %v106 = vld [vmem:[#allocation7 + $0x8] sm:$0x1]
    %v107 = vld [vmem:[%s4] sm:$0x1]
    %v109 = vperm.slane %v107, 0
    %v112 = vsel %vm73, %v104, 0
    %v115 = vsel %vm77, %v106, 0
    %117 = vmatpush.msra.mxu0 0.0
    %118 = vmatpush.msra.mxu0 0.0
    %119 = vmatpush.msra.mxu0 0.0
    %120 = vmatpush.msra.mxu0 0.0
    %121 = vmatpush.msra.mxu0 0.0
    %122 = vmatpush.msra.mxu0 0.0
    %123 = vmatpush.msra.mxu0 0.0
    %124 = vmatpush.msra.mxu0 0.0
    %125 = vmatpush.msra.mxu0 0.0
    %126 = vmatpush.msra.mxu0 0.0
    %127 = vmatpush.msra.mxu0 0.0
    %128 = vmatpush.msra.mxu0 0.0
    %129 = vmatpush.msra.mxu0 0.0
    %130 = vmatpush.msra.mxu0 0.0
    %131 = vmatpush.msra.mxu0 %v115
    %132 = vmatpush.msra.mxu0 %v105
    %133 = vmatmul.f32.gmra.mxu0 %v112
    %v134 = vpop.f32.mrf.mxu0
    %v135 = vadd.f32 %v109, %v134
    %136 = vdwg.mxu0
    %v137 = vmul.f32 %v135, 0.5
    %v138 = vtanh.pop %v137
    %v139 = vmul.f32 %v138, 0.5
    %v140 = vadd.f32 %v139, 0.5
    %141 = vst.msk [vmem:[#allocation8] sm:$0xff] %vm73, %v140
    // Predicated region
    $region34: #{neural_net_forward.1} parent=1 // pred_check
      _
    $region35: #{neural_net_forward.1} parent=1 // pred_check_branch
      %143 = sbr.rel (0) target = $region37
    $region36: #{neural_net_forward.1} parent=1 // pred_region
      %145 = vsyncadd [#allocation4], 0
      %s147 = sshll.u32 [#allocation8], 4
      %s148 = int_to_ptr.vmem [resolvable:$true] %s147
      %s149 = sshll.u32 %s5, 4
      %s150 = int_to_ptr.hbm [resolvable:$true] %s149
      %152 = dma.vmem_to_hbm [thread:$0]  %s148, 128, %s150, [#allocation4]
    $region37: #{neural_net_forward.1} parent=1 // pred_fallthru
      _
    // Predicated region
    $region38: #{neural_net_forward.1} parent=1 // pred_check
      _
    $region39: #{neural_net_forward.1} parent=1 // pred_check_branch
      %154 = sbr.rel (0) target = $region41
    $region40: #{neural_net_forward.1} parent=1 // pred_region
      %156 = dma.done [#allocation4], 128
    $region41: #{neural_net_forward.1} parent=1 // pred_fallthru
      _
    %157 = vsyncpa [#allocation3], 1
    %158 = vsyncpa [#allocation6], 1
    %159 = vsyncpa [#allocation4], 1

</llo_original>
